<compile_context>
chip_gen: v7x
topology: tpu7x:2x2x1
jax: 0.10.0
libtpu: 0.0.40
codegen_flags: <defaults>
</compile_context>

<pallas_src>
import functools
import math

import jax
import jax.numpy as jnp
from jax.experimental import pallas as pl
from jax.experimental.pallas import tpu as pltpu

_LANE = 128
_SUBLANE = 8


def _round_up(x: int, m: int) -> int:
    return (x + m - 1) // m * m


# -----------------------------------------------------------------------------
# Hardware queries (defensive: fall back to safe defaults if unavailable).
# -----------------------------------------------------------------------------
def _num_tensorcores() -> int:
    try:
        dev = jax.devices()[0]
        kind = str(getattr(dev, "device_kind", "")).lower()
        if "v7" in kind:                       # v7x: 2 TensorCores per chip
            return 2
        nc = getattr(dev, "num_cores", None)
        if isinstance(nc, int) and nc > 0:
            return nc
    except Exception:
        pass
    return 1                                   # v5e / v6e: single TC


def _vmem_limit_bytes() -> int:
    try:
        cap = int(pltpu.get_tpu_info().vmem_capacity_bytes)
    except Exception:
        cap = 64 * 1024 * 1024                 # conservative fallback (v7x-safe)
    # ~25% headroom; 128 MiB (v5e/v6e) -> 96 MiB cap, 64 MiB (v7x/TC) -> 48 MiB
    return min(96 * 1024 * 1024, (cap * 3) // 4)


# -----------------------------------------------------------------------------
# Kernels
# -----------------------------------------------------------------------------
def _fused_kernel(x_ref, wf_ref, o_ref):
    # act=False: y = x @ (W2 @ W1)^T  -- single MXU pass per row tile.
    o_ref[...] = jnp.dot(
        x_ref[...], wf_ref[...], preferred_element_type=jnp.float32
    ).astype(o_ref.dtype)


def _two_layer_act_kernel(x_ref, w1t_ref, w2t_ref, o_ref, *, compute_dtype):
    # act=True: swish between and after the two matmuls.
    h = jnp.dot(x_ref[...], w1t_ref[...], preferred_element_type=jnp.float32)
    h = h.astype(compute_dtype)        # bf16 when weights are bf16 (layer-2 MXU rate)
    h = h * jax.nn.sigmoid(h)          # swish (EUP slot)
    y = jnp.dot(h, w2t_ref[...], preferred_element_type=jnp.float32)
    y = y * jax.nn.sigmoid(y)          # swish
    o_ref[...] = y.astype(o_ref.dtype)


# -----------------------------------------------------------------------------
# One-time weight plumbing (call once at parameter setup, NOT per forward).
# -----------------------------------------------------------------------------
def prepare_two_layer_params(w1, w2, *, act: bool = False, lane: int = _LANE):
    """w1: (mid_ch, in_ch), w2: (out_ch, mid_ch) in torch (out, in) layout."""
    mid_ch, in_ch = w1.shape
    out_ch, mid_ch_w = w2.shape
    assert mid_ch == mid_ch_w, "w1/w2 middle-channel mismatch"

    in_p = _round_up(in_ch, lane)
    out_p = _round_up(out_ch, lane)

    if not act:
        # No nonlinearity between layers -> fold weights (mathematically exact).
        wf = (w2.astype(jnp.float32) @ w1.astype(jnp.float32)).T.astype(w1.dtype)
        wf_p = jnp.zeros((in_p, out_p), w1.dtype).at[:in_ch, :out_ch].set(wf)
        weights = (wf_p,)
    else:
        mid_p = _round_up(mid_ch, lane)
        w1t = jnp.zeros((in_p, mid_p), w1.dtype).at[:in_ch, :mid_ch].set(w1.T)
        w2t = jnp.zeros((mid_p, out_p), w2.dtype).at[:mid_ch, :out_ch].set(w2.T)
        weights = (w1t, w2t)

    return dict(act=act, in_ch=in_ch, out_ch=out_ch, weights=weights)


# -----------------------------------------------------------------------------
# Forward apply
# -----------------------------------------------------------------------------
def two_layer_linear_apply(x, params, *, tm_target: int = 512,
                           num_cores: int | None = None,
                           vmem_limit_bytes: int | None = None,
                           interpret: bool = False):
    """x: (N, in_ch).  params: output of prepare_two_layer_params."""
    N, in_ch = x.shape
    assert in_ch == params["in_ch"], "x feature dim mismatch"
    act = params["act"]
    weights = params["weights"]
    in_p = weights[0].shape[0]
    out_p = weights[-1].shape[-1]
    out_ch = params["out_ch"]
    x_dtype = x.dtype

    if num_cores is None:
        num_cores = _num_tensorcores()
    if vmem_limit_bytes is None:
        vmem_limit_bytes = _vmem_limit_bytes()

    # --- pad x columns to lane-padded in_p (exact: the extra weight rows are 0)
    if in_p != in_ch:
        x = jnp.pad(x, ((0, 0), (0, in_p - in_ch)))

    # --- resident weights: single-buffer only when the block is big enough to
    # matter (constant index_map -> never re-fetched; double-buffering wastes VMEM)
    w_bytes_each = [int(w.size) * w.dtype.itemsize for w in weights]
    single_buffer_w = [b > (2 << 20) for b in w_bytes_each]
    resident_w_bytes = sum(b * (1 if s else 2)
                           for b, s in zip(w_bytes_each, single_buffer_w))

    # --- balanced row tiling: same step count as tm_target, minimal row padding
    steps = max(1, pl.cdiv(max(N, 1), tm_target))
    if num_cores >= 2 and steps < 2 and N > _SUBLANE:
        steps = 2                              # v7x megacore: a tile per TC
    tm = _round_up(pl.cdiv(max(N, 1), steps), _SUBLANE)

    # clamp tm so (2x x-tile + 2x out-tile + resident weights + f32 h) fits VMEM
    def _footprint(t):
        b = x_dtype.itemsize
        f = 2 * t * in_p * b + 2 * t * out_p * b + resident_w_bytes
        if act:
            f += t * weights[0].shape[1] * 4   # f32/compute intermediate h
        return f

    while tm > _SUBLANE and _footprint(tm) > int(vmem_limit_bytes * 0.9):
        tm = _round_up(pl.cdiv(tm, 2), _SUBLANE)

    grid = pl.cdiv(max(N, 1), tm)
    n_pad = grid * tm
    x_p = x if n_pad == N else jnp.pad(x, ((0, n_pad - N), (0, 0)))

    # --- specs
    def w_spec(shape, single):
        if single:
            return pl.BlockSpec(shape, lambda i: (0, 0),
                                pipeline_mode=pl.Buffered(1))
        return pl.BlockSpec(shape, lambda i: (0, 0))

    x_spec = pl.BlockSpec((tm, in_p), lambda i: (i, 0))
    o_spec = pl.BlockSpec((tm, out_p), lambda i: (i, 0))

    if not act:
        kernel = _fused_kernel
        in_specs = [x_spec, w_spec(weights[0].shape, single_buffer_w[0])]
    else:
        compute_dtype = (jnp.bfloat16 if weights[-1].dtype == jnp.bfloat16
                         else jnp.float32)
        kernel = functools.partial(_two_layer_act_kernel,
                                   compute_dtype=compute_dtype)
        in_specs = [x_spec,
                    w_spec(weights[0].shape, single_buffer_w[0]),
                    w_spec(weights[1].shape, single_buffer_w[1])]

    y_p = pl.pallas_call(
        kernel,
        out_shape=jax.ShapeDtypeStruct((n_pad, out_p), x_dtype),
        grid_spec=pltpu.PrefetchScalarGridSpec(
            num_scalar_prefetch=0,
            grid=(grid,),
            in_specs=in_specs,
            out_specs=o_spec,
        ),
        compiler_params=pltpu.CompilerParams(
            dimension_semantics=("parallel",),
            vmem_limit_bytes=int(vmem_limit_bytes),
        ),
        interpret=interpret,
    )(x_p, *weights)

    # strip row / lane padding
    return y_p[:N, :out_ch]


def two_layer_linear(x, w1, w2, *, act: bool = False, **kwargs):
    """One-shot convenience wrapper.  In a real model, call
    prepare_two_layer_params once and reuse it with two_layer_linear_apply."""
    return two_layer_linear_apply(x, prepare_two_layer_params(w1, w2, act=act),
                                  **kwargs)


# -----------------------------------------------------------------------------
# Demo / correctness check
# -----------------------------------------------------------------------------
def glorot_uniform(key, shape, dtype=jnp.float32):
    # matches torch_geometric inits.glorot: U(-a, a), a = sqrt(6/(fan_in+fan_out))
    fan_out, fan_in = shape
    a = math.sqrt(6.0 / (fan_in + fan_out))
    return jax.random.uniform(key, shape, dtype, minval=-a, maxval=a)


if __name__ == "__main__":
    # small shapes consistent with the module: a batch of node features
    N, in_ch, mid_ch, out_ch = 16, 32, 64, 32
    key = jax.random.PRNGKey(0)
    kx, k1, k2 = jax.random.split(key, 3)

    x = jax.random.normal(kx, (N, in_ch), dtype=jnp.float32)
    w1 = glorot_uniform(k1, (mid_ch, in_ch))   # lin1.weight (out, in)
    w2 = glorot_uniform(k2, (out_ch, mid_ch))  # lin2.weight (out, in)

    # default module config: bias=False, act=False  -> fused single-matmul path
    params = prepare_two_layer_params(w1, w2, act=False)   # one-time weight prep
    y = jax.block_until_ready(two_layer_linear_apply(x, params))
    y_ref = (x @ w1.T) @ w2.T
    assert jnp.allclose(y, y_ref, atol=1e-4, rtol=1e-4), "act=False mismatch"

    # act=True path (swish after each linear; two-matmul kernel)
    def swish(v):
        return v * jax.nn.sigmoid(v)

    params_act = prepare_two_layer_params(w1, w2, act=True)
    y_act = jax.block_until_ready(two_layer_linear_apply(x, params_act))
    y_act_ref = swish(swish(x @ w1.T) @ w2.T)
    assert jnp.allclose(y_act, y_act_ref, atol=1e-5, rtol=1e-5), "act=True mismatch"

    print("KERNEL_OK")
</pallas_src>

<mosaic_0001>
module attributes {stable_mosaic.version = 11 : i64} {
  func.func @_fused_kernel(%arg0: i32, %arg1: memref<16x128xf32, #tpu.memory_space<vmem>>, %arg2: memref<128x128xf32, #tpu.memory_space<vmem>>, %arg3: memref<16x128xf32, #tpu.memory_space<vmem>>) attributes {dimension_semantics = [#tpu.dimension_semantics<parallel>], iteration_bounds = array<i64: 1>, scalar_prefetch = 0 : i64, scratch_operands = 0 : i64, tpu.core_type = #tpu.core_type<tc>, window_params = [{transform_indices = @transform_0, window_bounds = array<i64: 16, 128>}, {pipeline_mode = #tpu.pipeline_mode<synchronous>, transform_indices = @transform_1, window_bounds = array<i64: 128, 128>}, {transform_indices = @transform_2, window_bounds = array<i64: 16, 128>}]} {
    %c0 = arith.constant 0 : index
    %c0_0 = arith.constant 0 : index
    %0 = vector.load %arg1[%c0, %c0_0] : memref<16x128xf32, #tpu.memory_space<vmem>>, vector<16x128xf32>
    %c0_1 = arith.constant 0 : index
    %c0_2 = arith.constant 0 : index
    %1 = vector.load %arg2[%c0_1, %c0_2] : memref<128x128xf32, #tpu.memory_space<vmem>>, vector<128x128xf32>
    %cst = arith.constant dense<0.000000e+00> : vector<16x128xf32>
    %2 = tpu.matmul %0, %1, %cst {dimension_numbers = #tpu.dot_dimension_numbers<[1], [0], [0], [1], [0, 0, 1, 1], [], []>} : vector<16x128xf32>, vector<128x128xf32>, vector<16x128xf32> -> vector<16x128xf32>
    %c0_3 = arith.constant 0 : index
    %c0_4 = arith.constant 0 : index
    %3 = vector.load %arg3[%c0_3, %c0_4] : memref<16x128xf32, #tpu.memory_space<vmem>>, vector<16x128xf32>
    tpu.vector_store %arg3[%c0_3, %c0_4], %2 {strides = array<i32>} : memref<16x128xf32, #tpu.memory_space<vmem>>, vector<16x128xf32>,
    return
  }
  func.func @transform_0(%arg0: i32) -> (i32, i32) {
    %c0_i32 = arith.constant 0 : i32
    %c0_i32_0 = arith.constant 0 : i32
    return %arg0, %c0_i32 : i32, i32
  }
  func.func @transform_1(%arg0: i32) -> (i32, i32) {
    %c0_i32 = arith.constant 0 : i32
    %c0_i32_0 = arith.constant 0 : i32
    %c0_i32_1 = arith.constant 0 : i32
    return %c0_i32, %c0_i32_0 : i32, i32
  }
  func.func @transform_2(%arg0: i32) -> (i32, i32) {
    %c0_i32 = arith.constant 0 : i32
    %c0_i32_0 = arith.constant 0 : i32
    return %arg0, %c0_i32 : i32, i32
  }
}

</mosaic_0001>

<llo_original>
// kernel: tpu_custom_call.1
$region0: #{tpu_custom_call.1}
  #allocation0 [shape = 'u32[]', space=smem, size = 0x4, offset = 0x4, fixed_abs, tag = 'smem constant byte address 0x4 - core index']
  #allocation1 [shape = 'u32[144,128]{1,0:T(1,128)}', space=vmem, size = 0x12000, scoped, tag = 'internal scratch']
  %s0 = inlined_call_operand.hbm [shape: f32[16,128], index: 0, kind: input, shape index: {}]
  %s1 = inlined_call_operand.hbm [shape: f32[128,128], index: 1, kind: input, shape index: {}]
  %s2 = inlined_call_operand.hbm [shape: f32[16,128], index: 2, kind: output, shape index: {}]
  %s3 = sld [smem:[#allocation0]]
  $region26: #{tpu_custom_call.1} parent=0
    _
  %s5 = ssub.s32 1, %s3
  %s6 = scalar_select 0, %s5, %s3
  $region1: #{tpu_custom_call.1} parent=0
    #allocation2 [shape = 'u8[8192]{0}', space=vmem, size = 0x2000, scoped, tag = 'input window, operand 0, single buffered']
    #allocation3 [shape = 's32[1]{0}', space=sflag, size = 0x4, scoped, tag = 'scoped memory for tpu_custom_call.1']
    #allocation4 [shape = 's32[1]{0}', space=sflag, size = 0x4, scoped, tag = 'scoped memory for tpu_custom_call.1']
    #allocation5 [shape = 'u8[65536]{0}', space=vmem, size = 0x10000, scoped, tag = 'input window, operand 1, single buffered']
    #allocation6 [shape = 's32[1]{0}', space=sflag, size = 0x4, scoped, tag = 'scoped memory for tpu_custom_call.1']
    #allocation7 [shape = 'u8[8192]{0}', space=vmem, size = 0x2000, scoped, tag = 'output window, operand 0, single buffered']
    %7 = vsyncpa [#allocation3], 0
    %8 = vsyncpa [#allocation6], 0
    %9 = vsyncpa [#allocation4], 0
    // Predicated region
    $region2: #{tpu_custom_call.1} parent=1 // pred_check
      _
    $region3: #{tpu_custom_call.1} parent=1 // pred_check_branch
      %11 = sbr.rel (0) target = $region5
    $region4: #{tpu_custom_call.1} parent=1 // pred_region
      %s13 = ssub.s32 256, 256
      %14 = vsyncadd [#allocation3], %s13
      %s15 = sshll.u32 [#allocation2], 4
      %s16 = int_to_ptr.vmem [resolvable:$true] %s15
      %21 = dma.hbm_to_vmem [thread:$0]  %s0, 256, %s16, [#allocation3], 128, 128, 8
    $region5: #{tpu_custom_call.1} parent=1 // pred_fallthru
      _
    // Predicated region
    $region6: #{tpu_custom_call.1} parent=1 // pred_check
      _
    $region7: #{tpu_custom_call.1} parent=1 // pred_check_branch
      %23 = sbr.rel (0) target = $region9
    $region8: #{tpu_custom_call.1} parent=1 // pred_region
      %s25 = ssub.s32 2048, 2048
      %26 = vsyncadd [#allocation6], %s25
      %s27 = sshll.u32 [#allocation5], 4
      %s28 = int_to_ptr.vmem [resolvable:$true] %s27
      %33 = dma.hbm_to_vmem [thread:$0]  %s1, 2048, %s28, [#allocation6], 128, 128, 8
    $region9: #{tpu_custom_call.1} parent=1 // pred_fallthru
      _
    // Predicated region
    $region10: #{tpu_custom_call.1} parent=1 // pred_check
      _
    $region11: #{tpu_custom_call.1} parent=1 // pred_check_branch
      %35 = sbr.rel (0) target = $region13
    $region12: #{tpu_custom_call.1} parent=1 // pred_region
      %36 = dma.done [#allocation3], 256
    $region13: #{tpu_custom_call.1} parent=1 // pred_fallthru
      _
    // Predicated region
    $region14: #{tpu_custom_call.1} parent=1 // pred_check
      _
    $region15: #{tpu_custom_call.1} parent=1 // pred_check_branch
      %38 = sbr.rel (0) target = $region17
    $region16: #{tpu_custom_call.1} parent=1 // pred_region
      %39 = dma.done [#allocation6], 2048
    $region17: #{tpu_custom_call.1} parent=1 // pred_fallthru
      _
    %v40 = vld [vmem:[#allocation2] sm:$0xff]
    %v41 = vld [vmem:[#allocation2 + $0x8] sm:$0xff]
    %v42 = vld [vmem:[#allocation5] sm:$0xff]
    %v43 = vld [vmem:[#allocation5 + $0x8] sm:$0xff]
    %v44 = vld [vmem:[#allocation5 + $0x10] sm:$0xff]
    %v45 = vld [vmem:[#allocation5 + $0x18] sm:$0xff]
    %v46 = vld [vmem:[#allocation5 + $0x20] sm:$0xff]
    %v47 = vld [vmem:[#allocation5 + $0x28] sm:$0xff]
    %v48 = vld [vmem:[#allocation5 + $0x30] sm:$0xff]
    %v49 = vld [vmem:[#allocation5 + $0x38] sm:$0xff]
    %v50 = vld [vmem:[#allocation5 + $0x40] sm:$0xff]
    %v51 = vld [vmem:[#allocation5 + $0x48] sm:$0xff]
    %v52 = vld [vmem:[#allocation5 + $0x50] sm:$0xff]
    %v53 = vld [vmem:[#allocation5 + $0x58] sm:$0xff]
    %v54 = vld [vmem:[#allocation5 + $0x60] sm:$0xff]
    %v55 = vld [vmem:[#allocation5 + $0x68] sm:$0xff]
    %v56 = vld [vmem:[#allocation5 + $0x70] sm:$0xff]
    %v57 = vld [vmem:[#allocation5 + $0x78] sm:$0xff]
    %58 = vmatprep.subr.mxu0 0.0
    %59 = vmatpush1.msra.mxu0 %v42
    %60 = vmatprep.subr.mxu0 0.0
    %61 = vmatpush1.msra.mxu0 %v43
    %62 = vmatprep.subr.mxu0 0.0
    %63 = vmatpush1.msra.mxu0 %v44
    %64 = vmatprep.subr.mxu0 0.0
    %65 = vmatpush1.msra.mxu0 %v45
    %66 = vmatprep.subr.mxu0 0.0
    %67 = vmatpush1.msra.mxu0 %v46
    %68 = vmatprep.subr.mxu0 0.0
    %69 = vmatpush1.msra.mxu0 %v47
    %70 = vmatprep.subr.mxu0 0.0
    %71 = vmatpush1.msra.mxu0 %v48
    %72 = vmatprep.subr.mxu0 0.0
    %73 = vmatpush1.msra.mxu0 %v49
    %74 = vmatprep.subr.mxu0 0.0
    %75 = vmatpush1.msra.mxu0 %v50
    %76 = vmatprep.subr.mxu0 0.0
    %77 = vmatpush1.msra.mxu0 %v51
    %78 = vmatprep.subr.mxu0 0.0
    %79 = vmatpush1.msra.mxu0 %v52
    %80 = vmatprep.subr.mxu0 0.0
    %81 = vmatpush1.msra.mxu0 %v53
    %82 = vmatprep.subr.mxu0 0.0
    %83 = vmatpush1.msra.mxu0 %v54
    %84 = vmatprep.subr.mxu0 0.0
    %85 = vmatpush1.msra.mxu0 %v55
    %86 = vmatprep.subr.mxu0 0.0
    %87 = vmatpush1.msra.mxu0 %v56
    %88 = vmatprep.subr.mxu0 0.0
    %89 = vmatpush1.msra.mxu0 %v57
    %90 = vmatprep.subr.mxu0 0.0
    %91 = vmatpush1.msra.mxu0 0.0
    %92 = vmatprep.subr.mxu0 0.0
    %93 = vmatpush1.msra.mxu0 0.0
    %94 = vmatprep.subr.mxu0 0.0
    %95 = vmatpush1.msra.mxu0 0.0
    %96 = vmatprep.subr.mxu0 0.0
    %97 = vmatpush1.msra.mxu0 0.0
    %98 = vmatprep.subr.mxu0 0.0
    %99 = vmatpush1.msra.mxu0 0.0
    %100 = vmatprep.subr.mxu0 0.0
    %101 = vmatpush1.msra.mxu0 0.0
    %102 = vmatprep.subr.mxu0 0.0
    %103 = vmatpush1.msra.mxu0 0.0
    %104 = vmatprep.subr.mxu0 0.0
    %105 = vmatpush1.msra.mxu0 0.0
    %106 = vmatprep.subr.mxu0 0.0
    %107 = vmatpush1.msra.mxu0 0.0
    %108 = vmatprep.subr.mxu0 0.0
    %109 = vmatpush1.msra.mxu0 0.0
    %110 = vmatprep.subr.mxu0 0.0
    %111 = vmatpush1.msra.mxu0 0.0
    %112 = vmatprep.subr.mxu0 0.0
    %113 = vmatpush1.msra.mxu0 0.0
    %114 = vmatprep.subr.mxu0 0.0
    %115 = vmatpush1.msra.mxu0 0.0
    %116 = vmatprep.subr.mxu0 0.0
    %117 = vmatpush1.msra.mxu0 0.0
    %118 = vmatprep.subr.mxu0 0.0
    %119 = vmatpush1.msra.mxu0 0.0
    %120 = vmatprep.subr.mxu0 0.0
    %121 = vmatpush1.msra.mxu0 0.0
    %122 = vmatprep.mubr.f32.mxu0 0.0
    %123 = vmatmul.mubr.f32.gmra.mrb[0].mxu0 %v40
    %v124 = vpop.f32.mrb[0].mxu0
    %v125 = vadd.f32 0.0, %v124
    %v126 = vpop.f32.mrb[0].mxu0
    %127 = vmatprep.mubr.f32.mxu0 0.0
    %128 = vmatmul.mubr.f32.gmra.mrb[0].mxu0 %v41
    %v129 = vpop.f32.mrb[0].mxu0
    %v130 = vadd.f32 0.0, %v129
    %v131 = vpop.f32.mrb[0].mxu0
    %132 = vdwg.mxu0
    %133 = vst [vmem:[#allocation7] sm:$0xff] %v125
    %134 = vst [vmem:[#allocation7 + $0x8] sm:$0xff] %v130
    // Predicated region
    $region18: #{tpu_custom_call.1} parent=1 // pred_check
      _
    $region19: #{tpu_custom_call.1} parent=1 // pred_check_branch
      %136 = sbr.rel (0) target = $region21
    $region20: #{tpu_custom_call.1} parent=1 // pred_region
      %s138 = ssub.s32 256, 256
      %139 = vsyncadd [#allocation4], %s138
      %s140 = sshll.u32 [#allocation7], 4
      %s141 = int_to_ptr.vmem [resolvable:$true] %s140
      %146 = dma.vmem_to_hbm [thread:$0]  %s141, 256, %s2, [#allocation4], 128, 128, 8
    $region21: #{tpu_custom_call.1} parent=1 // pred_fallthru
      _
    // Predicated region
    $region22: #{tpu_custom_call.1} parent=1 // pred_check
      _
    $region23: #{tpu_custom_call.1} parent=1 // pred_check_branch
      %148 = sbr.rel (0) target = $region25
    $region24: #{tpu_custom_call.1} parent=1 // pred_region
      %149 = dma.done [#allocation4], 256
    $region25: #{tpu_custom_call.1} parent=1 // pred_fallthru
      _
    %150 = vsyncpa [#allocation3], 1
    %151 = vsyncpa [#allocation6], 1
    %152 = vsyncpa [#allocation4], 1

</llo_original>
